<compile_context>
chip_gen: v6e
topology: v6e:2x2x1
jax: 0.10.0
libtpu: 0.0.40
codegen_flags: <defaults>
</compile_context>

<pallas_src>
import math

import jax
import jax.numpy as jnp
from jax.experimental import pallas as pl
from jax.experimental.pallas import tpu as pltpu


def _round_up(x: int, m: int) -> int:
    return (x + m - 1) // m * m


def _auto_block_b(B: int, K0: int, K1: int, itemsize: int) -> int:
    """Derive the batch tile from the feature count and a VMEM budget."""
    # Real HBM bytes moved per batch column (in + out).
    hbm_per_col = 2 * (K0 + 3 * K1) * itemsize
    # Padded VMEM bytes per batch column: in+out tiles (sublane-padded to 8),
    # double-buffered, plus a rough allowance for f32 temporaries (z, a, casts).
    k0p, k1p = _round_up(K0, 8), _round_up(K1, 8)
    vmem_per_col = 2 * 2 * (k0p + 3 * k1p) * itemsize + 6 * (k0p + k1p) * 4

    target_payload = 8 << 20   # ~8 MiB of HBM traffic per grid step
    vmem_budget = 40 << 20     # conservative: fits v7x's 64 MiB physical VMEM

    tb = min(target_payload // hbm_per_col, vmem_budget // vmem_per_col)
    # Keep >= 4 grid tiles when the batch allows, so the "parallel" batch axis
    # can be sharded across both v7x TensorCores and the pipeline has overlap.
    tb = min(tb, max(B // 4, 128))
    return max(128, (tb // 128) * 128)


def _make_kernel(activation_fn_str: str, K0: int, use_mxu: bool):
    def act(z):
        if activation_fn_str == "ReLU":
            return jnp.maximum(z, 0.0)
        # tanh-approximate GELU: jnp.tanh lowers to the EUP (its own VLIW slot),
        # unlike the exact erf form which becomes a multi-term VALU polynomial.
        # TODO(synk): torch.nn.GELU() defaults to the exact erf form; the tanh
        # approximation differs by ~1e-3.  Switch to jax.lax.erf if exact torch
        # parity is required and its Mosaic lowering has been verified.
        c = math.sqrt(2.0 / math.pi)
        return 0.5 * z * (1.0 + jnp.tanh(c * (z + 0.044715 * (z * z * z))))

    if use_mxu:
        # Large-K0 path: one MXU matmul, one activation pass, aligned slices.
        def kernel(s_ref, v_ref, w_ref, b_ref, out_s_ref, out_v_ref):
            s = s_ref[...].astype(jnp.float32)                              # [K0, TB]
            z = jnp.dot(w_ref[...], s,
                        preferred_element_type=jnp.float32) + b_ref[...]    # [N, TB]
            a = act(z)
            a_s = a[:K0]           # prefix slice (offset 0: relayout-free)
            a_v = a[K0:]           # starts at K0 (tile-aligned when K0 % 8 == 0)
            out_s_ref[...] = (a_s * s).astype(out_s_ref.dtype)
            v = v_ref[...].astype(jnp.float32)                              # [3, K1, TB]
            out_v_ref[...] = (a_v[None, :, :] * v).astype(out_v_ref.dtype)
        return kernel

    # Tiny-K0 path: skip the MXU.  z = W @ s is built as an unrolled VPU FMA of
    # weight columns ([K,1], lane-broadcast) times rows of s ([1,TB],
    # sublane-broadcast); pure VALU work that stays well under the HBM-bound
    # step time for small feature counts.
    def kernel(s_ref, v_ref, wsc_ref, bs_ref, wvc_ref, bv_ref, out_s_ref, out_v_ref):
        s = s_ref[...].astype(jnp.float32)                                  # [K0, TB]
        zs = None
        zv = None
        for j in range(K0):                                                 # fully unrolled
            srow = s[j:j + 1, :]                                            # [1, TB]
            ps = wsc_ref[j] * srow                                          # [K0,1]*[1,TB] -> [K0,TB]
            pv = wvc_ref[j] * srow                                          # [K1,1]*[1,TB] -> [K1,TB]
            zs = ps if zs is None else zs + ps
            zv = pv if zv is None else zv + pv
        zs = zs + bs_ref[...]                                               # + [K0,1] bias
        zv = zv + bv_ref[...]                                               # + [K1,1] bias
        a_s = act(zs)
        a_v = act(zv)
        out_s_ref[...] = (a_s * s).astype(out_s_ref.dtype)
        # Single broadcasted 3-D store for all three vector components.
        v = v_ref[...].astype(jnp.float32)                                  # [3, K1, TB]
        out_v_ref[...] = (a_v[None, :, :] * v).astype(out_v_ref.dtype)
    return kernel


def activation_layer(scalars, vectors, weight, bias,
                     activation_fn_str: str = "ReLU", block_b: int | None = None):
    """scalars: [K0, B], vectors: [3, K1, B] (same dtype: f32 or bf16),
    weight: f32[N, K0] with N = K0 + K1, bias: f32[N].
    Returns (out_scalars [K0, B], out_vectors [3, K1, B]) in the input dtype."""
    K0, B = scalars.shape
    three, K1, B2 = vectors.shape
    assert three == 3 and B2 == B and K0 >= 1 and K1 >= 1
    N = K0 + K1
    assert weight.shape == (N, K0) and bias.shape == (N,)
    assert activation_fn_str in ("ReLU", "GELU")
    assert scalars.dtype == vectors.dtype
    io_dtype = scalars.dtype

    # ---- batch tile selection (payload-, VMEM- and megacore-aware) ----------
    if block_b is None:
        block_b = _auto_block_b(B, K0, K1, jnp.dtype(io_dtype).itemsize)
    TB = B if block_b >= B else block_b
    assert TB == B or TB % 128 == 0, "block_b must be a multiple of 128 (or >= B)"
    grid = (pl.cdiv(B, TB),)

    # ---- one-time parameter prep: fold sqrt(1/K0) into the weights ----------
    scale = math.sqrt(1.0 / K0)
    w = weight.astype(jnp.float32) * scale                                   # [N, K0]

    # VPU-FMA path while its VALU work is comfortably below the HBM-bound step
    # time (crossover around K0 ~ 16 for f32 I/O); MXU path for larger K0.
    use_mxu = K0 > 16
    kernel = _make_kernel(activation_fn_str, K0, use_mxu)

    if use_mxu:
        params = (w, bias.astype(jnp.float32)[:, None])                      # [N,K0], [N,1]
        param_specs = [
            pl.BlockSpec((N, K0), lambda i: (0, 0)),      # resident weight block
            pl.BlockSpec((N, 1), lambda i: (0, 0)),       # resident bias column
        ]
    else:
        ws, wv = w[:K0, :], w[K0:, :]                                        # [K0,K0], [K1,K0]
        wsc = jnp.transpose(ws)[:, :, None]                                  # [K0_in, K0, 1]
        wvc = jnp.transpose(wv)[:, :, None]                                  # [K0_in, K1, 1]
        bs = bias[:K0].astype(jnp.float32)[:, None]                          # [K0, 1]
        bv = bias[K0:].astype(jnp.float32)[:, None]                          # [K1, 1]
        params = (wsc, bs, wvc, bv)
        param_specs = [
            pl.BlockSpec((K0, K0, 1), lambda i: (0, 0, 0)),
            pl.BlockSpec((K0, 1), lambda i: (0, 0)),
            pl.BlockSpec((K0, K1, 1), lambda i: (0, 0, 0)),
            pl.BlockSpec((K1, 1), lambda i: (0, 0)),
        ]

    out_s, out_v = pl.pallas_call(
        kernel,
        grid=grid,
        in_specs=[
            pl.BlockSpec((K0, TB), lambda i: (0, i)),        # scalars tile (pipelined)
            pl.BlockSpec((3, K1, TB), lambda i: (0, 0, i)),  # vectors tile (pipelined)
            *param_specs,                                    # tiny resident parameters
        ],
        out_specs=(
            pl.BlockSpec((K0, TB), lambda i: (0, i)),
            pl.BlockSpec((3, K1, TB), lambda i: (0, 0, i)),
        ),
        out_shape=(
            jax.ShapeDtypeStruct((K0, B), io_dtype),
            jax.ShapeDtypeStruct((3, K1, B), io_dtype),
        ),
        compiler_params=pltpu.CompilerParams(
            dimension_semantics=("parallel",),   # batch tiles independent -> megacore
            vmem_limit_bytes=48 * 1024 * 1024,   # headroom over the 40 MiB tile budget;
                                                 # still safe on v7x's 64 MiB VMEM
        ),
    )(scalars, vectors, *params)
    return out_s, out_v


def _reference_natural(scalars_bk, vectors_bk3, weight, bias, activation_fn_str):
    """Pure-JAX reference in the natural node-major layout (scalars [B,K0],
    vectors [B,K1,3]); mirrors the PyTorch module's per-node math.  HIGHEST
    precision so the f32 reference is not demoted to bf16 MXU passes."""
    B, K0 = scalars_bk.shape
    z = jnp.einsum("bk,nk->bn", scalars_bk.astype(jnp.float32),
                   weight.astype(jnp.float32),
                   precision=jax.lax.Precision.HIGHEST)
    z = z * math.sqrt(1.0 / K0) + bias[None, :].astype(jnp.float32)
    if activation_fn_str == "ReLU":
        a = jnp.maximum(z, 0.0)
    else:  # tanh-approximate GELU (matches the kernel)
        c = math.sqrt(2.0 / math.pi)
        a = 0.5 * z * (1.0 + jnp.tanh(c * (z + 0.044715 * z**3)))
    out_s = a[:, :K0] * scalars_bk.astype(jnp.float32)
    out_v = a[:, K0:, None] * vectors_bk3.astype(jnp.float32)
    return out_s, out_v


if __name__ == "__main__":
    # input_irreps_id = "4x0e+2x1o"  ->  internal LinearLayer output = "6x0e"
    B, K0, K1 = 2048, 4, 2
    N = K0 + K1

    key = jax.random.PRNGKey(0)
    k1, k2, k3, k4 = jax.random.split(key, 4)
    scalars_nat = jax.random.normal(k1, (B, K0), jnp.float32)   # node-major (reference)
    vectors_nat = jax.random.normal(k2, (B, K1, 3), jnp.float32)
    weight = jax.random.normal(k3, (N, K0), jnp.float32)        # LinearLayer weights
    bias = jax.random.normal(k4, (N,), jnp.float32)             # LinearLayer biases

    # Feature-major packing for the kernel (test-harness-only transposes).
    scalars_fm = scalars_nat.T                                  # [K0, B]
    vectors_fm = jnp.transpose(vectors_nat, (2, 1, 0))          # [3, K1, B]

    # Case 1: ReLU, f32 I/O, auto-derived tile (VPU-FMA path, 4-tile grid).
    out_s, out_v = activation_layer(scalars_fm, vectors_fm, weight, bias, "ReLU")
    jax.block_until_ready((out_s, out_v))
    ref_s, ref_v = _reference_natural(scalars_nat, vectors_nat, weight, bias, "ReLU")
    assert jnp.allclose(out_s.T, ref_s, atol=1e-5, rtol=1e-5)
    assert jnp.allclose(jnp.transpose(out_v, (2, 1, 0)), ref_v, atol=1e-5, rtol=1e-5)

    # Case 2: GELU, f32 I/O, non-divisible batch with an explicit small tile
    # (exercises the partial/masked last grid block).
    Bp = 1000
    s2_nat, v2_nat = scalars_nat[:Bp], vectors_nat[:Bp]
    out_s2, out_v2 = activation_layer(s2_nat.T, jnp.transpose(v2_nat, (2, 1, 0)),
                                      weight, bias, "GELU", block_b=256)
    jax.block_until_ready((out_s2, out_v2))
    ref_s2, ref_v2 = _reference_natural(s2_nat, v2_nat, weight, bias, "GELU")
    assert jnp.allclose(out_s2.T, ref_s2, atol=5e-4, rtol=5e-4)
    assert jnp.allclose(jnp.transpose(out_v2, (2, 1, 0)), ref_v2, atol=5e-4, rtol=5e-4)

    # Case 3: ReLU with bf16 HBM I/O (compute stays f32 inside the kernel).
    s_bf = scalars_fm.astype(jnp.bfloat16)
    v_bf = vectors_fm.astype(jnp.bfloat16)
    out_s3, out_v3 = activation_layer(s_bf, v_bf, weight, bias, "ReLU")
    jax.block_until_ready((out_s3, out_v3))
    ref_s3, ref_v3 = _reference_natural(s_bf.T.astype(jnp.float32),
                                        jnp.transpose(v_bf, (2, 1, 0)).astype(jnp.float32),
                                        weight, bias, "ReLU")
    assert out_s3.dtype == jnp.bfloat16 and out_v3.dtype == jnp.bfloat16
    assert jnp.allclose(out_s3.T.astype(jnp.float32), ref_s3, atol=1e-2, rtol=1e-2)
    assert jnp.allclose(jnp.transpose(out_v3, (2, 1, 0)).astype(jnp.float32), ref_v3,
                        atol=1e-2, rtol=1e-2)

    print("KERNEL_OK")
</pallas_src>

<mosaic_0001>
module attributes {stable_mosaic.version = 11 : i64} {
  func.func @kernel(%arg0: i32, %arg1: memref<4x512xf32, #tpu.memory_space<vmem>>, %arg2: memref<3x2x512xf32, #tpu.memory_space<vmem>>, %arg3: memref<4x4x1xf32, #tpu.memory_space<vmem>>, %arg4: memref<4x1xf32, #tpu.memory_space<vmem>>, %arg5: memref<4x2x1xf32, #tpu.memory_space<vmem>>, %arg6: memref<2x1xf32, #tpu.memory_space<vmem>>, %arg7: memref<4x512xf32, #tpu.memory_space<vmem>>, %arg8: memref<3x2x512xf32, #tpu.memory_space<vmem>>) attributes {dimension_semantics = [#tpu.dimension_semantics<parallel>], iteration_bounds = array<i64: 4>, scalar_prefetch = 0 : i64, scratch_operands = 0 : i64, tpu.core_type = #tpu.core_type<tc>, window_params = [{transform_indices = @transform_0, window_bounds = array<i64: 4, 512>}, {transform_indices = @transform_1, window_bounds = array<i64: 3, 2, 512>}, {pipeline_mode = #tpu.pipeline_mode<synchronous>, transform_indices = @transform_2, window_bounds = array<i64: 4, 4, 1>}, {pipeline_mode = #tpu.pipeline_mode<synchronous>, transform_indices = @transform_3, window_bounds = array<i64: 4, 1>}, {pipeline_mode = #tpu.pipeline_mode<synchronous>, transform_indices = @transform_4, window_bounds = array<i64: 4, 2, 1>}, {pipeline_mode = #tpu.pipeline_mode<synchronous>, transform_indices = @transform_5, window_bounds = array<i64: 2, 1>}, {transform_indices = @transform_6, window_bounds = array<i64: 4, 512>}, {transform_indices = @transform_7, window_bounds = array<i64: 3, 2, 512>}]} {
    %c0 = arith.constant 0 : index
    %c0_0 = arith.constant 0 : index
    %0 = vector.load %arg1[%c0, %c0_0] : memref<4x512xf32, #tpu.memory_space<vmem>>, vector<4x512xf32>
    %1 = vector.extract_strided_slice %0 {offsets = [0, 0], sizes = [1, 512], strides = [1, 1]} : vector<4x512xf32> to vector<1x512xf32>
    %c0_1 = arith.constant 0 : index
    %c0_2 = arith.constant 0 : index
    %c0_3 = arith.constant 0 : index
    %2 = vector.load %arg3[%c0_1, %c0_2, %c0_3] : memref<4x4x1xf32, #tpu.memory_space<vmem>>, vector<1x4x1xf32>
    %3 = vector.shape_cast %2 : vector<1x4x1xf32> to vector<4x1xf32>
    %4 = vector.broadcast %3 : vector<4x1xf32> to vector<4x512xf32>
    %5 = vector.broadcast %1 : vector<1x512xf32> to vector<4x512xf32>
    %6 = arith.mulf %4, %5 : vector<4x512xf32>
    %c0_4 = arith.constant 0 : index
    %c0_5 = arith.constant 0 : index
    %c0_6 = arith.constant 0 : index
    %7 = vector.load %arg5[%c0_4, %c0_5, %c0_6] : memref<4x2x1xf32, #tpu.memory_space<vmem>>, vector<1x2x1xf32>
    %8 = vector.shape_cast %7 : vector<1x2x1xf32> to vector<2x1xf32>
    %9 = vector.broadcast %8 : vector<2x1xf32> to vector<2x512xf32>
    %10 = vector.broadcast %1 : vector<1x512xf32> to vector<2x512xf32>
    %11 = arith.mulf %9, %10 : vector<2x512xf32>
    %12 = vector.extract_strided_slice %0 {offsets = [1, 0], sizes = [1, 512], strides = [1, 1]} : vector<4x512xf32> to vector<1x512xf32>
    %c1 = arith.constant 1 : index
    %c0_7 = arith.constant 0 : index
    %c0_8 = arith.constant 0 : index
    %13 = vector.load %arg3[%c1, %c0_7, %c0_8] : memref<4x4x1xf32, #tpu.memory_space<vmem>>, vector<1x4x1xf32>
    %14 = vector.shape_cast %13 : vector<1x4x1xf32> to vector<4x1xf32>
    %15 = vector.broadcast %14 : vector<4x1xf32> to vector<4x512xf32>
    %16 = vector.broadcast %12 : vector<1x512xf32> to vector<4x512xf32>
    %17 = arith.mulf %15, %16 : vector<4x512xf32>
    %c1_9 = arith.constant 1 : index
    %c0_10 = arith.constant 0 : index
    %c0_11 = arith.constant 0 : index
    %18 = vector.load %arg5[%c1_9, %c0_10, %c0_11] : memref<4x2x1xf32, #tpu.memory_space<vmem>>, vector<1x2x1xf32>
    %19 = vector.shape_cast %18 : vector<1x2x1xf32> to vector<2x1xf32>
    %20 = vector.broadcast %19 : vector<2x1xf32> to vector<2x512xf32>
    %21 = vector.broadcast %12 : vector<1x512xf32> to vector<2x512xf32>
    %22 = arith.mulf %20, %21 : vector<2x512xf32>
    %23 = arith.addf %6, %17 : vector<4x512xf32>
    %24 = arith.addf %11, %22 : vector<2x512xf32>
    %25 = vector.extract_strided_slice %0 {offsets = [2, 0], sizes = [1, 512], strides = [1, 1]} : vector<4x512xf32> to vector<1x512xf32>
    %c2 = arith.constant 2 : index
    %c0_12 = arith.constant 0 : index
    %c0_13 = arith.constant 0 : index
    %26 = vector.load %arg3[%c2, %c0_12, %c0_13] : memref<4x4x1xf32, #tpu.memory_space<vmem>>, vector<1x4x1xf32>
    %27 = vector.shape_cast %26 : vector<1x4x1xf32> to vector<4x1xf32>
    %28 = vector.broadcast %27 : vector<4x1xf32> to vector<4x512xf32>
    %29 = vector.broadcast %25 : vector<1x512xf32> to vector<4x512xf32>
    %30 = arith.mulf %28, %29 : vector<4x512xf32>
    %c2_14 = arith.constant 2 : index
    %c0_15 = arith.constant 0 : index
    %c0_16 = arith.constant 0 : index
    %31 = vector.load %arg5[%c2_14, %c0_15, %c0_16] : memref<4x2x1xf32, #tpu.memory_space<vmem>>, vector<1x2x1xf32>
    %32 = vector.shape_cast %31 : vector<1x2x1xf32> to vector<2x1xf32>
    %33 = vector.broadcast %32 : vector<2x1xf32> to vector<2x512xf32>
    %34 = vector.broadcast %25 : vector<1x512xf32> to vector<2x512xf32>
    %35 = arith.mulf %33, %34 : vector<2x512xf32>
    %36 = arith.addf %23, %30 : vector<4x512xf32>
    %37 = arith.addf %24, %35 : vector<2x512xf32>
    %38 = vector.extract_strided_slice %0 {offsets = [3, 0], sizes = [1, 512], strides = [1, 1]} : vector<4x512xf32> to vector<1x512xf32>
    %c3 = arith.constant 3 : index
    %c0_17 = arith.constant 0 : index
    %c0_18 = arith.constant 0 : index
    %39 = vector.load %arg3[%c3, %c0_17, %c0_18] : memref<4x4x1xf32, #tpu.memory_space<vmem>>, vector<1x4x1xf32>
    %40 = vector.shape_cast %39 : vector<1x4x1xf32> to vector<4x1xf32>
    %41 = vector.broadcast %40 : vector<4x1xf32> to vector<4x512xf32>
    %42 = vector.broadcast %38 : vector<1x512xf32> to vector<4x512xf32>
    %43 = arith.mulf %41, %42 : vector<4x512xf32>
    %c3_19 = arith.constant 3 : index
    %c0_20 = arith.constant 0 : index
    %c0_21 = arith.constant 0 : index
    %44 = vector.load %arg5[%c3_19, %c0_20, %c0_21] : memref<4x2x1xf32, #tpu.memory_space<vmem>>, vector<1x2x1xf32>
    %45 = vector.shape_cast %44 : vector<1x2x1xf32> to vector<2x1xf32>
    %46 = vector.broadcast %45 : vector<2x1xf32> to vector<2x512xf32>
    %47 = vector.broadcast %38 : vector<1x512xf32> to vector<2x512xf32>
    %48 = arith.mulf %46, %47 : vector<2x512xf32>
    %49 = arith.addf %36, %43 : vector<4x512xf32>
    %50 = arith.addf %37, %48 : vector<2x512xf32>
    %c0_22 = arith.constant 0 : index
    %c0_23 = arith.constant 0 : index
    %51 = vector.load %arg4[%c0_22, %c0_23] : memref<4x1xf32, #tpu.memory_space<vmem>>, vector<4x1xf32>
    %52 = vector.broadcast %51 : vector<4x1xf32> to vector<4x512xf32>
    %53 = arith.addf %49, %52 : vector<4x512xf32>
    %c0_24 = arith.constant 0 : index
    %c0_25 = arith.constant 0 : index
    %54 = vector.load %arg6[%c0_24, %c0_25] : memref<2x1xf32, #tpu.memory_space<vmem>>, vector<2x1xf32>
    %55 = vector.broadcast %54 : vector<2x1xf32> to vector<2x512xf32>
    %56 = arith.addf %50, %55 : vector<2x512xf32>
    %cst = arith.constant 0.000000e+00 : f32
    %57 = vector.broadcast %cst : f32 to vector<4x512xf32>
    %58 = arith.maximumf %53, %57 : vector<4x512xf32>
    %cst_26 = arith.constant 0.000000e+00 : f32
    %59 = vector.broadcast %cst_26 : f32 to vector<2x512xf32>
    %60 = arith.maximumf %56, %59 : vector<2x512xf32>
    %61 = arith.mulf %58, %0 : vector<4x512xf32>
    %c0_27 = arith.constant 0 : index
    %c0_28 = arith.constant 0 : index
    %62 = vector.load %arg7[%c0_27, %c0_28] : memref<4x512xf32, #tpu.memory_space<vmem>>, vector<4x512xf32>
    tpu.vector_store %arg7[%c0_27, %c0_28], %61 {strides = array<i32>} : memref<4x512xf32, #tpu.memory_space<vmem>>, vector<4x512xf32>,
    %c0_29 = arith.constant 0 : index
    %c0_30 = arith.constant 0 : index
    %c0_31 = arith.constant 0 : index
    %63 = vector.load %arg2[%c0_29, %c0_30, %c0_31] : memref<3x2x512xf32, #tpu.memory_space<vmem>>, vector<3x2x512xf32>
    %64 = vector.shape_cast %60 : vector<2x512xf32> to vector<1x2x512xf32>
    %65 = vector.broadcast %64 : vector<1x2x512xf32> to vector<3x2x512xf32>
    %66 = arith.mulf %65, %63 : vector<3x2x512xf32>
    %c0_32 = arith.constant 0 : index
    %c0_33 = arith.constant 0 : index
    %c0_34 = arith.constant 0 : index
    %67 = vector.load %arg8[%c0_32, %c0_33, %c0_34] : memref<3x2x512xf32, #tpu.memory_space<vmem>>, vector<3x2x512xf32>
    tpu.vector_store %arg8[%c0_32, %c0_33, %c0_34], %66 {strides = array<i32>} : memref<3x2x512xf32, #tpu.memory_space<vmem>>, vector<3x2x512xf32>,
    return
  }
  func.func @transform_0(%arg0: i32) -> (i32, i32) {
    %c0_i32 = arith.constant 0 : i32
    %c0_i32_0 = arith.constant 0 : i32
    return %c0_i32, %arg0 : i32, i32
  }
  func.func @transform_1(%arg0: i32) -> (i32, i32, i32) {
    %c0_i32 = arith.constant 0 : i32
    %c0_i32_0 = arith.constant 0 : i32
    %c0_i32_1 = arith.constant 0 : i32
    return %c0_i32, %c0_i32_0, %arg0 : i32, i32, i32
  }
  func.func @transform_2(%arg0: i32) -> (i32, i32, i32) {
    %c0_i32 = arith.constant 0 : i32
    %c0_i32_0 = arith.constant 0 : i32
    %c0_i32_1 = arith.constant 0 : i32
    %c0_i32_2 = arith.constant 0 : i32
    return %c0_i32, %c0_i32_0, %c0_i32_1 : i32, i32, i32
  }
  func.func @transform_3(%arg0: i32) -> (i32, i32) {
    %c0_i32 = arith.constant 0 : i32
    %c0_i32_0 = arith.constant 0 : i32
    %c0_i32_1 = arith.constant 0 : i32
    return %c0_i32, %c0_i32_0 : i32, i32
  }
  func.func @transform_4(%arg0: i32) -> (i32, i32, i32) {
    %c0_i32 = arith.constant 0 : i32
    %c0_i32_0 = arith.constant 0 : i32
    %c0_i32_1 = arith.constant 0 : i32
    %c0_i32_2 = arith.constant 0 : i32
    return %c0_i32, %c0_i32_0, %c0_i32_1 : i32, i32, i32
  }
  func.func @transform_5(%arg0: i32) -> (i32, i32) {
    %c0_i32 = arith.constant 0 : i32
    %c0_i32_0 = arith.constant 0 : i32
    %c0_i32_1 = arith.constant 0 : i32
    return %c0_i32, %c0_i32_0 : i32, i32
  }
  func.func @transform_6(%arg0: i32) -> (i32, i32) {
    %c0_i32 = arith.constant 0 : i32
    %c0_i32_0 = arith.constant 0 : i32
    return %c0_i32, %arg0 : i32, i32
  }
  func.func @transform_7(%arg0: i32) -> (i32, i32, i32) {
    %c0_i32 = arith.constant 0 : i32
    %c0_i32_0 = arith.constant 0 : i32
    %c0_i32_1 = arith.constant 0 : i32
    return %c0_i32, %c0_i32_0, %arg0 : i32, i32, i32
  }
}

</mosaic_0001>

<llo_original>
// kernel: tpu_custom_call.1
$region0: #{tpu_custom_call.1}
  #allocation0 [shape = 'u32[]', space=smem, size = 0x4, offset = 0x4, fixed_abs, tag = 'smem constant byte address 0x4 - core index']
  #allocation1 [shape = 'u32[144,128]{1,0:T(1,128)}', space=vmem, size = 0x12000, scoped, tag = 'internal scratch']
  %s0 = inlined_call_operand.hbm [shape: f32[4,2048], index: 0, kind: input, shape index: {}]
  %s1 = inlined_call_operand.hbm [shape: f32[3,2,2048], index: 1, kind: input, shape index: {}]
  %s2 = inlined_call_operand.vmem [shape: f32[4,4,1], index: 2, kind: input, shape index: {}]
  %s3 = inlined_call_operand.vmem [shape: f32[4,1], index: 3, kind: input, shape index: {}]
  %s4 = inlined_call_operand.vmem [shape: f32[4,2,1], index: 4, kind: input, shape index: {}]
  %s5 = inlined_call_operand.vmem [shape: f32[2,1], index: 5, kind: input, shape index: {}]
  %s6 = inlined_call_operand.hbm [shape: f32[4,2048], index: 6, kind: output, shape index: {0}]
  %s7 = inlined_call_operand.hbm [shape: f32[3,2,2048], index: 7, kind: output, shape index: {1}]
  %8 = xla_tuple %s6, %s7
  %s9 = sld [smem:[#allocation0]]
  $region73: #{tpu_custom_call.1} parent=0
    _
  %s11 = ssub.s32 1, %s9
  %s12 = scalar_select 0, %s11, %s9
  $region1: #{tpu_custom_call.1} parent=0
    #allocation2 [shape = 'u8[16384]{0}', space=vmem, size = 0x4000, scoped, tag = 'input window, operand 0']
    #allocation3 [shape = 's32[2]{0}', space=sflag, size = 0x8, scoped, tag = 'scoped memory for tpu_custom_call.1']
    #allocation4 [shape = 's32[2]{0}', space=sflag, size = 0x8, scoped, tag = 'scoped memory for tpu_custom_call.1']
    #allocation5 [shape = 'u8[24576]{0}', space=vmem, size = 0x6000, scoped, tag = 'input window, operand 1']
    #allocation6 [shape = 's32[2]{0}', space=sflag, size = 0x8, scoped, tag = 'scoped memory for tpu_custom_call.1']
    #allocation7 [shape = 'u8[16384]{0}', space=vmem, size = 0x4000, scoped, tag = 'output window, operand 0']
    #allocation8 [shape = 'u8[24576]{0}', space=vmem, size = 0x6000, scoped, tag = 'output window, operand 1']
    #allocation9 [shape = 's32[2]{0}', space=sflag, size = 0x8, scoped, tag = 'scoped memory for tpu_custom_call.1']
    %13 = vsyncpa [#allocation3], 0
    %s14 = scalar_lea.sflag [#allocation3], 1
    %15 = vsyncpa %s14, 0
    %16 = vsyncpa [#allocation6], 0
    %s17 = scalar_lea.sflag [#allocation6], 1
    %18 = vsyncpa %s17, 0
    %19 = vsyncpa [#allocation4], 0
    %s20 = scalar_lea.sflag [#allocation4], 1
    %21 = vsyncpa %s20, 0
    %22 = vsyncpa [#allocation9], 0
    %s23 = scalar_lea.sflag [#allocation9], 1
    %24 = vsyncpa %s23, 0
    loop: start=0, step=1, limit=6
    $region2: #{tpu_custom_call.1} parent=1 // loop_pre_header
      _
    $region3: #{tpu_custom_call.1} parent=1 // loop_header
      %s26 = sphi 0, %s30
      %p27 = scmp.ge.s32.totalorder %s26, 6
      %s36 = sphi 0, %s38
      %s39 = sphi 0, %s36
      %s40 = sphi 0, %s39
      %s56 = sphi 0, %s40
      %s62 = sphi 0, %s64
      %s65 = sphi 0, %s62
      %s66 = sphi 0, %s65
      %s82 = sphi 0, %s66
      %s86 = sphi 0, %s86
      %s88 = sphi 0, %s86
      %s89 = sphi 0, %s88
      %s103 = sphi 0, %s89
      %s107 = sphi 0, %s107
      %s109 = sphi 0, %s107
      %s110 = sphi 0, %s109
      %s124 = sphi 0, %s110
      %s128 = sphi 0, %s128
      %s130 = sphi 0, %s128
      %s131 = sphi 0, %s130
      %s145 = sphi 0, %s131
      %s149 = sphi 0, %s149
      %s151 = sphi 0, %s149
      %s152 = sphi 0, %s151
      %s166 = sphi 0, %s152
      %s172 = sphi 0, %s174
      %s175 = sphi 0, %s172
      %s176 = sphi 0, %s175
      %s192 = sphi 0, %s176
      %s198 = sphi 0, %s200
      %s201 = sphi 0, %s198
      %s202 = sphi 0, %s201
      %s218 = sphi 0, %s202
    $region4: #{tpu_custom_call.1} parent=1 // loop_header_branch
      %29 = sbr.rel (%p27) target = $region8
    $region5: #{tpu_custom_call.1} parent=1 // loop_body
      %s31 = ssub.s32 %s26, 1
      %s32 = ssub.s32 %s26, 2
      %s33 = sadd.s32 %s26, 1
      %s34 = ssub.s32 %s26, %s33
      %p35 = scmp.eq.s32.totalorder %s34, 0
      %s37 = sadd.s32 %s36, 1
      %s38 = scalar_select %p35, %s36, %s37
      %p41 = pneg %p35
      %p42 = scmp.eq.s32.totalorder %s26, 3
      %p43 = por %p41, %p42
      %p44 = scmp.ne.s32.totalorder %s36, %s39
      %p45 = scmp.eq.s32.totalorder %s26, 0
      %p46 = por %p44, %p45
      %p47 = scmp.ne.s32.totalorder %s36, %s39
      %p48 = scmp.eq.s32.totalorder %s31, 3
      %p49 = por %p47, %p48
      %p50 = scmp.ne.s32.totalorder %s39, %s40
      %p51 = scmp.eq.s32.totalorder %s31, 0
      %p52 = por %p50, %p51
      %p53 = scmp.ne.s32.totalorder %s39, %s40
      %p54 = scmp.eq.s32.totalorder %s32, 3
      %p55 = por %p53, %p54
      %p57 = scmp.ne.s32.totalorder %s40, %s56
      %p58 = scmp.eq.s32.totalorder %s32, 0
      %p59 = por %p57, %p58
      %s60 = ssub.s32 %s26, %s33
      %p61 = scmp.eq.s32.totalorder %s60, 0
      %s63 = sadd.s32 %s62, 1
      %s64 = scalar_select %p61, %s62, %s63
      %p67 = pneg %p61
      %p68 = scmp.eq.s32.totalorder %s26, 3
      %p69 = por %p67, %p68
      %p70 = scmp.ne.s32.totalorder %s62, %s65
      %p71 = scmp.eq.s32.totalorder %s26, 0
      %p72 = por %p70, %p71
      %p73 = scmp.ne.s32.totalorder %s62, %s65
      %p74 = scmp.eq.s32.totalorder %s31, 3
      %p75 = por %p73, %p74
      %p76 = scmp.ne.s32.totalorder %s65, %s66
      %p77 = scmp.eq.s32.totalorder %s31, 0
      %p78 = por %p76, %p77
      %p79 = scmp.ne.s32.totalorder %s65, %s66
      %p80 = scmp.eq.s32.totalorder %s32, 3
      %p81 = por %p79, %p80
      %p83 = scmp.ne.s32.totalorder %s66, %s82
      %p84 = scmp.eq.s32.totalorder %s32, 0
      %p85 = por %p83, %p84
      %s87 = sadd.s32 %s86, 1
      %p90 = scmp.eq.s32.totalorder %s26, 3
      %p91 = scmp.ne.s32.totalorder %s86, %s88
      %p92 = scmp.eq.s32.totalorder %s26, 0
      %p93 = por %p91, %p92
      %p94 = scmp.ne.s32.totalorder %s86, %s88
      %p95 = scmp.eq.s32.totalorder %s31, 3
      %p96 = por %p94, %p95
      %p97 = scmp.ne.s32.totalorder %s88, %s89
      %p98 = scmp.eq.s32.totalorder %s31, 0
      %p99 = por %p97, %p98
      %p100 = scmp.ne.s32.totalorder %s88, %s89
      %p101 = scmp.eq.s32.totalorder %s32, 3
      %p102 = por %p100, %p101
      %p104 = scmp.ne.s32.totalorder %s89, %s103
      %p105 = scmp.eq.s32.totalorder %s32, 0
      %p106 = por %p104, %p105
      %s108 = sadd.s32 %s107, 1
      %p111 = scmp.eq.s32.totalorder %s26, 3
      %p112 = scmp.ne.s32.totalorder %s107, %s109
      %p113 = scmp.eq.s32.totalorder %s26, 0
      %p114 = por %p112, %p113
      %p115 = scmp.ne.s32.totalorder %s107, %s109
      %p116 = scmp.eq.s32.totalorder %s31, 3
      %p117 = por %p115, %p116
      %p118 = scmp.ne.s32.totalorder %s109, %s110
      %p119 = scmp.eq.s32.totalorder %s31, 0
      %p120 = por %p118, %p119
      %p121 = scmp.ne.s32.totalorder %s109, %s110
      %p122 = scmp.eq.s32.totalorder %s32, 3
      %p123 = por %p121, %p122
      %p125 = scmp.ne.s32.totalorder %s110, %s124
      %p126 = scmp.eq.s32.totalorder %s32, 0
      %p127 = por %p125, %p126
      %s129 = sadd.s32 %s128, 1
      %p132 = scmp.eq.s32.totalorder %s26, 3
      %p133 = scmp.ne.s32.totalorder %s128, %s130
      %p134 = scmp.eq.s32.totalorder %s26, 0
      %p135 = por %p133, %p134
      %p136 = scmp.ne.s32.totalorder %s128, %s130
      %p137 = scmp.eq.s32.totalorder %s31, 3
      %p138 = por %p136, %p137
      %p139 = scmp.ne.s32.totalorder %s130, %s131
      %p140 = scmp.eq.s32.totalorder %s31, 0
      %p141 = por %p139, %p140
      %p142 = scmp.ne.s32.totalorder %s130, %s131
      %p143 = scmp.eq.s32.totalorder %s32, 3
      %p144 = por %p142, %p143
      %p146 = scmp.ne.s32.totalorder %s131, %s145
      %p147 = scmp.eq.s32.totalorder %s32, 0
      %p148 = por %p146, %p147
      %s150 = sadd.s32 %s149, 1
      %p153 = scmp.eq.s32.totalorder %s26, 3
      %p154 = scmp.ne.s32.totalorder %s149, %s151
      %p155 = scmp.eq.s32.totalorder %s26, 0
      %p156 = por %p154, %p155
      %p157 = scmp.ne.s32.totalorder %s149, %s151
      %p158 = scmp.eq.s32.totalorder %s31, 3
      %p159 = por %p157, %p158
      %p160 = scmp.ne.s32.totalorder %s151, %s152
      %p161 = scmp.eq.s32.totalorder %s31, 0
      %p162 = por %p160, %p161
      %p163 = scmp.ne.s32.totalorder %s151, %s152
      %p164 = scmp.eq.s32.totalorder %s32, 3
      %p165 = por %p163, %p164
      %p167 = scmp.ne.s32.totalorder %s152, %s166
      %p168 = scmp.eq.s32.totalorder %s32, 0
      %p169 = por %p167, %p168
      %s170 = ssub.s32 %s26, %s33
      %p171 = scmp.eq.s32.totalorder %s170, 0
      %s173 = sadd.s32 %s172, 1
      %s174 = scalar_select %p171, %s172, %s173
      %p177 = pneg %p171
      %p178 = scmp.eq.s32.totalorder %s26, 3
      %p179 = por %p177, %p178
      %p180 = scmp.ne.s32.totalorder %s172, %s175
      %p181 = scmp.eq.s32.totalorder %s26, 0
      %p182 = por %p180, %p181
      %p183 = scmp.ne.s32.totalorder %s172, %s175
      %p184 = scmp.eq.s32.totalorder %s31, 3
      %p185 = por %p183, %p184
      %p186 = scmp.ne.s32.totalorder %s175, %s176
      %p187 = scmp.eq.s32.totalorder %s31, 0
      %p188 = por %p186, %p187
      %p189 = scmp.ne.s32.totalorder %s175, %s176
      %p190 = scmp.eq.s32.totalorder %s32, 3
      %p191 = por %p189, %p190
      %p193 = scmp.ne.s32.totalorder %s176, %s192
      %p194 = scmp.eq.s32.totalorder %s32, 0
      %p195 = por %p193, %p194
      %s196 = ssub.s32 %s26, %s33
      %p197 = scmp.eq.s32.totalorder %s196, 0
      %s199 = sadd.s32 %s198, 1
      %s200 = scalar_select %p197, %s198, %s199
      %p203 = pneg %p197
      %p204 = scmp.eq.s32.totalorder %s26, 3
      %p205 = por %p203, %p204
      %p206 = scmp.ne.s32.totalorder %s198, %s201
      %p207 = scmp.eq.s32.totalorder %s26, 0
      %p208 = por %p206, %p207
      %p209 = scmp.ne.s32.totalorder %s198, %s201
      %p210 = scmp.eq.s32.totalorder %s31, 3
      %p211 = por %p209, %p210
      %p212 = scmp.ne.s32.totalorder %s201, %s202
      %p213 = scmp.eq.s32.totalorder %s31, 0
      %p214 = por %p212, %p213
      %p215 = scmp.ne.s32.totalorder %s201, %s202
      %p216 = scmp.eq.s32.totalorder %s32, 3
      %p217 = por %p215, %p216
      %p219 = scmp.ne.s32.totalorder %s202, %s218
      %p220 = scmp.eq.s32.totalorder %s32, 0
      %p221 = por %p219, %p220
      %p222 = scmp.le.s32.totalorder 1, %s26
      %p223 = scmp.lt.s32.totalorder %s26, 5
      %p224 = pnand %p222, %p223
      %p225 = pneg %p224
      // Predicated region
      $region9: #{tpu_custom_call.1} parent=5 // pred_check
        _
      $region10: #{tpu_custom_call.1} parent=5 // pred_check_branch
        %227 = sbr.rel (%p224) target = $region12
      $region11: #{tpu_custom_call.1} parent=5 // pred_region
        %s228 = ssub.s32 %s26, 1
        // Predicated region
        $region13: #{tpu_custom_call.1} parent=11 // pred_check
          %p229 = pneg %p99
        $region14: #{tpu_custom_call.1} parent=11 // pred_check_branch
          %231 = sbr.rel (%p229) target = $region16
        $region15: #{tpu_custom_call.1} parent=11 // pred_region
          _
        $region16: #{tpu_custom_call.1} parent=11 // pred_fallthru
          _
        // Predicated region
        $region17: #{tpu_custom_call.1} parent=11 // pred_check
          %p232 = pneg %p120
        $region18: #{tpu_custom_call.1} parent=11 // pred_check_branch
          %234 = sbr.rel (%p232) target = $region20
        $region19: #{tpu_custom_call.1} parent=11 // pred_region
          _
        $region20: #{tpu_custom_call.1} parent=11 // pred_fallthru
          _
        // Predicated region
        $region21: #{tpu_custom_call.1} parent=11 // pred_check
          %p235 = pneg %p141
        $region22: #{tpu_custom_call.1} parent=11 // pred_check_branch
          %237 = sbr.rel (%p235) target = $region24
        $region23: #{tpu_custom_call.1} parent=11 // pred_region
          _
        $region24: #{tpu_custom_call.1} parent=11 // pred_fallthru
          _
        // Predicated region
        $region25: #{tpu_custom_call.1} parent=11 // pred_check
          %p238 = pneg %p162
        $region26: #{tpu_custom_call.1} parent=11 // pred_check_branch
          %240 = sbr.rel (%p238) target = $region28
        $region27: #{tpu_custom_call.1} parent=11 // pred_region
          _
        $region28: #{tpu_custom_call.1} parent=11 // pred_fallthru
          _
      $region12: #{tpu_custom_call.1} parent=5 // pred_fallthru
        _
      %p241 = scmp.lt.s32.totalorder %s26, 4
      // Predicated region
      $region29: #{tpu_custom_call.1} parent=5 // pred_check
        %p242 = pneg %p241
      $region30: #{tpu_custom_call.1} parent=5 // pred_check_branch
        %244 = sbr.rel (%p242) target = $region32
      $region31: #{tpu_custom_call.1} parent=5 // pred_region
        // Predicated region
        $region33: #{tpu_custom_call.1} parent=31 // pred_check
          %p245 = pneg %p46
        $region34: #{tpu_custom_call.1} parent=31 // pred_check_branch
          %247 = sbr.rel (%p245) target = $region36
        $region35: #{tpu_custom_call.1} parent=31 // pred_region
          %s248 = sand.u32 %s36, 1
          %s249 = scalar_lea.sflag [#allocation3], %s248
          %s250 = sand.u32 %s36, 1
          %s251 = smul.addr %s250, 16
          %s252 = scalar_lea.vmem [#allocation2], %s251
          %s253 = smul.u32 4, %s26
          %s255 = ssub.s32 256, 256
          %256 = vsyncadd %s249, %s255
          %s257 = smul.addr %s253, 64
          %s258 = scalar_lea.hbm %s0, %s257
          %s260 = sshll.u32 %s252, 4
          %s261 = int_to_ptr.vmem [resolvable:$true] %s260
          %263 = dma.hbm_to_vmem [thread:$0]  %s258, 256, %s261, %s249
        $region36: #{tpu_custom_call.1} parent=31 // pred_fallthru
          _
        // Predicated region
        $region37: #{tpu_custom_call.1} parent=31 // pred_check
          %p264 = pneg %p72
        $region38: #{tpu_custom_call.1} parent=31 // pred_check_branch
          %266 = sbr.rel (%p264) target = $region40
        $region39: #{tpu_custom_call.1} parent=31 // pred_region
          %s267 = sand.u32 %s62, 1
          %s268 = scalar_lea.sflag [#allocation6], %s267
          %s269 = sand.u32 %s62, 1
          %s270 = smul.addr %s269, 24
          %s271 = scalar_lea.vmem [#allocation5], %s270
          %s272 = smul.u32 4, %s26
          %s274 = ssub.s32 384, 384
          %275 = vsyncadd %s268, %s274
          %s276 = smul.addr %s272, 32
          %s277 = scalar_lea.hbm %s1, %s276
          %s278 = sshll.u32 %s271, 4
          %s279 = int_to_ptr.vmem [resolvable:$true] %s278
          %284 = dma.hbm_to_vmem [thread:$0]  %s277, 384, %s279, %s268, 512, 128, 8
        $region40: #{tpu_custom_call.1} parent=31 // pred_fallthru
          _
      $region32: #{tpu_custom_call.1} parent=5 // pred_fallthru
        _
      %p285 = scmp.le.s32.totalorder 1, %s26
      %p286 = scmp.lt.s32.totalorder %s26, 5
      %p287 = pnand %p285, %p286
      %p288 = pneg %p287
      // Predicated region
      $region41: #{tpu_custom_call.1} parent=5 // pred_check
        _
      $region42: #{tpu_custom_call.1} parent=5 // pred_check_branch
        %290 = sbr.rel (%p287) target = $region44
      $region43: #{tpu_custom_call.1} parent=5 // pred_region
        %s291 = ssub.s32 %s26, 1
        %s292 = sand.u32 %s39, 1
        %s293 = scalar_lea.sflag [#allocation3], %s292
        %s294 = sand.u32 %s39, 1
        %s295 = smul.addr %s294, 16
        %s296 = scalar_lea.vmem [#allocation2], %s295
        // Predicated region
        $region45: #{tpu_custom_call.1} parent=43 // pred_check
          %p297 = pneg %p52
        $region46: #{tpu_custom_call.1} parent=43 // pred_check_branch
          %299 = sbr.rel (%p297) target = $region48
        $region47: #{tpu_custom_call.1} parent=43 // pred_region
          %300 = dma.done %s293, 256
        $region48: #{tpu_custom_call.1} parent=43 // pred_fallthru
          _
        %s301 = sand.u32 %s65, 1
        %s302 = scalar_lea.sflag [#allocation6], %s301
        %s303 = sand.u32 %s65, 1
        %s304 = smul.addr %s303, 24
        %s305 = scalar_lea.vmem [#allocation5], %s304
        // Predicated region
        $region49: #{tpu_custom_call.1} parent=43 // pred_check
          %p306 = pneg %p78
        $region50: #{tpu_custom_call.1} parent=43 // pred_check_branch
          %308 = sbr.rel (%p306) target = $region52
        $region51: #{tpu_custom_call.1} parent=43 // pred_region
          %309 = dma.done %s302, 384
        $region52: #{tpu_custom_call.1} parent=43 // pred_fallthru
          _
        %s310 = sand.u32 %s39, 1
        %s311 = scalar_lea.sflag [#allocation3], %s310
        %s312 = sand.u32 %s39, 1
        %s313 = smul.addr %s312, 16
        %s314 = scalar_lea.vmem [#allocation2], %s313
        %p315 = pneg %p52
        %p316 = pneg %p49
        %s317 = sand.u32 %s65, 1
        %s318 = scalar_lea.sflag [#allocation6], %s317
        %s319 = sand.u32 %s65, 1
        %s320 = smul.addr %s319, 24
        %s321 = scalar_lea.vmem [#allocation5], %s320
        %p322 = pneg %p78
        %p323 = pneg %p75
        %p324 = pneg %p99
        %p325 = pneg %p96
        %p326 = pneg %p120
        %p327 = pneg %p117
        %p328 = pneg %p141
        %p329 = pneg %p138
        %p330 = pneg %p162
        %p331 = pneg %p159
        %p332 = pneg %p188
        %p333 = pneg %p185
        %s334 = sand.u32 %s175, 1
        %s335 = scalar_lea.sflag [#allocation4], %s334
        %s336 = sand.u32 %s175, 1
        %s337 = smul.addr %s336, 16
        %s338 = scalar_lea.vmem [#allocation7], %s337
        %p339 = pneg %p214
        %p340 = pneg %p211
        %s341 = sand.u32 %s201, 1
        %s342 = scalar_lea.sflag [#allocation9], %s341
        %s343 = sand.u32 %s201, 1
        %s344 = smul.addr %s343, 24
        %s345 = scalar_lea.vmem [#allocation8], %s344
        %s346 = smul.u32 4, %s31
        %s347 = smul.u32 4, %s31
        %s348 = smul.u32 4, %s31
        %s349 = smul.u32 4, %s31
        %v350 = vld [vmem:[%s296] sm:$0xff]
        %v351 = vld [vmem:[%s296 + $0x8] sm:$0xff]
        %v352 = vld [vmem:[%s2] sm:$0xf]
        %354 = vset.pattern.permute.xlu0 0
        %355 = vperm.xlu0 %354, %v352
        %v356 = vpop.permute.xlu0 %355
        %v360 = vlaneseq
        %v361 = vshrl.u32 %v360, 7
        %v362 = vsub.s32 0, %v361
        %v363 = vrot.slane %v350, %v362
        %v364 = vlaneseq
        %v365 = vshrl.u32 %v364, 7
        %v366 = vsub.s32 4, %v365
        %v367 = vrot.slane %v350, %v366
        %v368 = vlaneseq
        %v369 = vshrl.u32 %v368, 7
        %v370 = vsub.s32 0, %v369
        %v371 = vrot.slane %v351, %v370
        %v372 = vlaneseq
        %v373 = vshrl.u32 %v372, 7
        %v374 = vsub.s32 4, %v373
        %v375 = vrot.slane %v351, %v374
        %v380 = vlaneseq
        %v381 = vshrl.u32 %v380, 7
        %v382 = vsub.s32 0, %v381
        %v383 = vrot.slane %v363, %v382
        %v384 = vlaneseq
        %v385 = vshrl.u32 %v384, 7
        %v386 = vsub.s32 0, %v385
        %v387 = vrot.slane %v367, %v386
        %v388 = vlaneseq
        %v389 = vshrl.u32 %v388, 7
        %v390 = vsub.s32 0, %v389
        %v391 = vrot.slane %v371, %v390
        %v392 = vlaneseq
        %v393 = vshrl.u32 %v392, 7
        %v394 = vsub.s32 0, %v393
        %v395 = vrot.slane %v375, %v394
        %v396 = vmul.f32 %v356, %v383
        %v397 = vmul.f32 %v356, %v387
        %v398 = vmul.f32 %v356, %v391
        %v399 = vmul.f32 %v356, %v395
        %v400 = vld [vmem:[%s4] sm:$0x3]
        %402 = vset.pattern.permute.xlu0 0
        %403 = vperm.xlu0 %402, %v400
        %v404 = vpop.permute.xlu0 %403
        %v406 = vmul.f32 %v404, %v383
        %v407 = vmul.f32 %v404, %v387
        %v408 = vmul.f32 %v404, %v391
        %v409 = vmul.f32 %v404, %v395
        %s410 = scalar_lea.vmem %s2, 4
        %v411 = vld [vmem:[%s410] sm:$0xf]
        %413 = vset.pattern.permute.xlu0 0
        %414 = vperm.xlu0 %413, %v411
        %v415 = vpop.permute.xlu0 %414
        %v417 = vlaneseq
        %v418 = vshrl.u32 %v417, 7
        %v419 = vsub.s32 1, %v418
        %v420 = vrot.slane %v350, %v419
        %v421 = vlaneseq
        %v422 = vshrl.u32 %v421, 7
        %v423 = vsub.s32 5, %v422
        %v424 = vrot.slane %v350, %v423
        %v425 = vlaneseq
        %v426 = vshrl.u32 %v425, 7
        %v427 = vsub.s32 1, %v426
        %v428 = vrot.slane %v351, %v427
        %v429 = vlaneseq
        %v430 = vshrl.u32 %v429, 7
        %v431 = vsub.s32 5, %v430
        %v432 = vrot.slane %v351, %v431
        %v437 = vlaneseq
        %v438 = vshrl.u32 %v437, 7
        %v439 = vsub.s32 1, %v438
        %v440 = vrot.slane %v420, %v439
        %v441 = vlaneseq
        %v442 = vshrl.u32 %v441, 7
        %v443 = vsub.s32 1, %v442
        %v444 = vrot.slane %v424, %v443
        %v445 = vlaneseq
        %v446 = vshrl.u32 %v445, 7
        %v447 = vsub.s32 1, %v446
        %v448 = vrot.slane %v428, %v447
        %v449 = vlaneseq
        %v450 = vshrl.u32 %v449, 7
        %v451 = vsub.s32 1, %v450
        %v452 = vrot.slane %v432, %v451
        %v453 = vmul.f32 %v415, %v440
        %v454 = vmul.f32 %v415, %v444
        %v455 = vmul.f32 %v415, %v448
        %v456 = vmul.f32 %v415, %v452
        %s457 = scalar_lea.vmem %s4, 2
        %v458 = vld [vmem:[%s457] sm:$0x3]
        %460 = vset.pattern.permute.xlu0 0
        %461 = vperm.xlu0 %460, %v458
        %v462 = vpop.permute.xlu0 %461
        %v464 = vmul.f32 %v462, %v440
        %v465 = vmul.f32 %v462, %v444
        %v466 = vmul.f32 %v462, %v448
        %v467 = vmul.f32 %v462, %v452
        %v468 = vadd.f32 %v396, %v453
        %v469 = vadd.f32 %v397, %v454
        %v470 = vadd.f32 %v398, %v455
        %v471 = vadd.f32 %v399, %v456
        %v472 = vadd.f32 %v406, %v464
        %v473 = vadd.f32 %v407, %v465
        %v474 = vadd.f32 %v408, %v466
        %v475 = vadd.f32 %v409, %v467
        %s476 = scalar_lea.vmem %s2, 8
        %v477 = vld [vmem:[%s476] sm:$0xf]
        %479 = vset.pattern.permute.xlu0 0
        %480 = vperm.xlu0 %479, %v477
        %v481 = vpop.permute.xlu0 %480
        %v483 = vlaneseq
        %v484 = vshrl.u32 %v483, 7
        %v485 = vsub.s32 2, %v484
        %v486 = vrot.slane %v350, %v485
        %v487 = vlaneseq
        %v488 = vshrl.u32 %v487, 7
        %v489 = vsub.s32 6, %v488
        %v490 = vrot.slane %v350, %v489
        %v491 = vlaneseq
        %v492 = vshrl.u32 %v491, 7
        %v493 = vsub.s32 2, %v492
        %v494 = vrot.slane %v351, %v493
        %v495 = vlaneseq
        %v496 = vshrl.u32 %v495, 7
        %v497 = vsub.s32 6, %v496
        %v498 = vrot.slane %v351, %v497
        %v503 = vlaneseq
        %v504 = vshrl.u32 %v503, 7
        %v505 = vsub.s32 2, %v504
        %v506 = vrot.slane %v486, %v505
        %v507 = vlaneseq
        %v508 = vshrl.u32 %v507, 7
        %v509 = vsub.s32 2, %v508
        %v510 = vrot.slane %v490, %v509
        %v511 = vlaneseq
        %v512 = vshrl.u32 %v511, 7
        %v513 = vsub.s32 2, %v512
        %v514 = vrot.slane %v494, %v513
        %v515 = vlaneseq
        %v516 = vshrl.u32 %v515, 7
        %v517 = vsub.s32 2, %v516
        %v518 = vrot.slane %v498, %v517
        %v519 = vmul.f32 %v481, %v506
        %v520 = vmul.f32 %v481, %v510
        %v521 = vmul.f32 %v481, %v514
        %v522 = vmul.f32 %v481, %v518
        %s523 = scalar_lea.vmem %s4, 4
        %v524 = vld [vmem:[%s523] sm:$0x3]
        %526 = vset.pattern.permute.xlu0 0
        %527 = vperm.xlu0 %526, %v524
        %v528 = vpop.permute.xlu0 %527
        %v530 = vmul.f32 %v528, %v506
        %v531 = vmul.f32 %v528, %v510
        %v532 = vmul.f32 %v528, %v514
        %v533 = vmul.f32 %v528, %v518
        %v534 = vadd.f32 %v468, %v519
        %v535 = vadd.f32 %v469, %v520
        %v536 = vadd.f32 %v470, %v521
        %v537 = vadd.f32 %v471, %v522
        %v538 = vadd.f32 %v472, %v530
        %v539 = vadd.f32 %v473, %v531
        %v540 = vadd.f32 %v474, %v532
        %v541 = vadd.f32 %v475, %v533
        %s542 = scalar_lea.vmem %s2, 12
        %v543 = vld [vmem:[%s542] sm:$0xf]
        %545 = vset.pattern.permute.xlu0 0
        %546 = vperm.xlu0 %545, %v543
        %v547 = vpop.permute.xlu0 %546
        %v549 = vlaneseq
        %v550 = vshrl.u32 %v549, 7
        %v551 = vsub.s32 3, %v550
        %v552 = vrot.slane %v350, %v551
        %v553 = vlaneseq
        %v554 = vshrl.u32 %v553, 7
        %v555 = vsub.s32 7, %v554
        %v556 = vrot.slane %v350, %v555
        %v557 = vlaneseq
        %v558 = vshrl.u32 %v557, 7
        %v559 = vsub.s32 3, %v558
        %v560 = vrot.slane %v351, %v559
        %v561 = vlaneseq
        %v562 = vshrl.u32 %v561, 7
        %v563 = vsub.s32 7, %v562
        %v564 = vrot.slane %v351, %v563
        %v569 = vlaneseq
        %v570 = vshrl.u32 %v569, 7
        %v571 = vsub.s32 3, %v570
        %v572 = vrot.slane %v552, %v571
        %v573 = vlaneseq
        %v574 = vshrl.u32 %v573, 7
        %v575 = vsub.s32 3, %v574
        %v576 = vrot.slane %v556, %v575
        %v577 = vlaneseq
        %v578 = vshrl.u32 %v577, 7
        %v579 = vsub.s32 3, %v578
        %v580 = vrot.slane %v560, %v579
        %v581 = vlaneseq
        %v582 = vshrl.u32 %v581, 7
        %v583 = vsub.s32 3, %v582
        %v584 = vrot.slane %v564, %v583
        %v585 = vmul.f32 %v547, %v572
        %v586 = vmul.f32 %v547, %v576
        %v587 = vmul.f32 %v547, %v580
        %v588 = vmul.f32 %v547, %v584
        %s589 = scalar_lea.vmem %s4, 6
        %v590 = vld [vmem:[%s589] sm:$0x3]
        %592 = vset.pattern.permute.xlu0 0
        %593 = vperm.xlu0 %592, %v590
        %v594 = vpop.permute.xlu0 %593
        %v596 = vmul.f32 %v594, %v572
        %v597 = vmul.f32 %v594, %v576
        %v598 = vmul.f32 %v594, %v580
        %v599 = vmul.f32 %v594, %v584
        %v600 = vadd.f32 %v534, %v585
        %v601 = vadd.f32 %v535, %v586
        %v602 = vadd.f32 %v536, %v587
        %v603 = vadd.f32 %v537, %v588
        %v604 = vadd.f32 %v538, %v596
        %v605 = vadd.f32 %v539, %v597
        %v606 = vadd.f32 %v540, %v598
        %v607 = vadd.f32 %v541, %v599
        %v608 = vld [vmem:[%s3] sm:$0xf]
        %610 = vset.pattern.permute.xlu0 0
        %611 = vperm.xlu0 %610, %v608
        %v612 = vpop.permute.xlu0 %611
        %v614 = vadd.f32 %v600, %v612
        %v615 = vadd.f32 %v601, %v612
        %v616 = vadd.f32 %v602, %v612
        %v617 = vadd.f32 %v603, %v612
        %v618 = vld [vmem:[%s5] sm:$0x3]
        %620 = vset.pattern.permute.xlu0 0
        %621 = vperm.xlu0 %620, %v618
        %v622 = vpop.permute.xlu0 %621
        %v624 = vadd.f32 %v604, %v622
        %v625 = vadd.f32 %v605, %v622
        %v626 = vadd.f32 %v606, %v622
        %v627 = vadd.f32 %v607, %v622
        %v628 = vmax.f32 %v614, 0.0
        %v629 = vmax.f32 %v615, 0.0
        %v630 = vmax.f32 %v616, 0.0
        %v631 = vmax.f32 %v617, 0.0
        %v632 = vmax.f32 %v624, 0.0
        %v633 = vmax.f32 %v625, 0.0
        %v634 = vmax.f32 %v626, 0.0
        %v635 = vmax.f32 %v627, 0.0
        %v636 = vcombine.high %v350, %v350
        %v637 = vcombine.high %v351, %v351
        %v640 = vmul.f32 %v628, %v350
        %v641 = vmul.f32 %v629, %v636
        %v642 = vmul.f32 %v630, %v351
        %v643 = vmul.f32 %v631, %v637
        %v648 = vcombine.low %v640, %v641
        %v649 = vcombine.low %v642, %v643
        %652 = vst [vmem:[%s338] sm:$0xff] %v648
        %653 = vst [vmem:[%s338 + $0x8] sm:$0xff] %v649
        %v654 = vld [vmem:[%s305] sm:$0xff]
        %v655 = vld [vmem:[%s305 + $0x8] sm:$0xff]
        %v656 = vld [vmem:[%s305 + $0x10] sm:$0xff]
        %v660 = vcombine.high %v654, %v654
        %v662 = vunpack.c.l.s4 1983009808
        %v663 = vunpack.c.0.s8 %v662
        %v664 = vlaneseq
        %v665 = vshrl.u32 %v664, 7
        %v666 = vsub.s32 %v663, %v665
        %v667 = vrot.slane %v654, %v666
        %v669 = vunpack.c.l.s4 1983009808
        %v670 = vunpack.c.0.s8 %v669
        %v671 = vlaneseq
        %v672 = vshrl.u32 %v671, 7
        %v673 = vsub.s32 %v670, %v672
        %v674 = vrot.slane %v660, %v673
        %v675 = vcombine.high %v667, %v667
        %v676 = vcombine.high %v674, %v674
        %v677 = vcombine.high %v655, %v655
        %v679 = vunpack.c.l.s4 1983009808
        %v680 = vunpack.c.0.s8 %v679
        %v681 = vlaneseq
        %v682 = vshrl.u32 %v681, 7
        %v683 = vsub.s32 %v680, %v682
        %v684 = vrot.slane %v655, %v683
        %v686 = vunpack.c.l.s4 1983009808
        %v687 = vunpack.c.0.s8 %v686
        %v688 = vlaneseq
        %v689 = vshrl.u32 %v688, 7
        %v690 = vsub.s32 %v687, %v689
        %v691 = vrot.slane %v677, %v690
        %v692 = vcombine.high %v684, %v684
        %v693 = vcombine.high %v691, %v691
        %v694 = vcombine.high %v656, %v656
        %v696 = vunpack.c.l.s4 1983009808
        %v697 = vunpack.c.0.s8 %v696
        %v698 = vlaneseq
        %v699 = vshrl.u32 %v698, 7
        %v700 = vsub.s32 %v697, %v699
        %v701 = vrot.slane %v656, %v700
        %v703 = vunpack.c.l.s4 1983009808
        %v704 = vunpack.c.0.s8 %v703
        %v705 = vlaneseq
        %v706 = vshrl.u32 %v705, 7
        %v707 = vsub.s32 %v704, %v706
        %v708 = vrot.slane %v694, %v707
        %v709 = vcombine.high %v701, %v701
        %v710 = vcombine.high %v708, %v708
        %v723 = vmul.f32 %v632, %v667
        %v724 = vmul.f32 %v633, %v675
        %v725 = vmul.f32 %v634, %v674
        %v726 = vmul.f32 %v635, %v676
        %v727 = vmul.f32 %v632, %v684
        %v728 = vmul.f32 %v633, %v692
        %v729 = vmul.f32 %v634, %v691
        %v730 = vmul.f32 %v635, %v693
        %v731 = vmul.f32 %v632, %v701
        %v732 = vmul.f32 %v633, %v709
        %v733 = vmul.f32 %v634, %v708
        %v734 = vmul.f32 %v635, %v710
        %v747 = vcombine.low %v723, %v724
        %v748 = vcombine.low %v725, %v726
        %v750 = vunpack.c.l.s4 1983009808
        %v751 = vunpack.c.0.s8 %v750
        %v752 = vlaneseq
        %v753 = vshrl.u32 %v752, 7
        %v754 = vsub.s32 %v751, %v753
        %v755 = vrot.slane %v747, %v754
        %v757 = vunpack.c.l.s4 1983009808
        %v758 = vunpack.c.0.s8 %v757
        %v759 = vlaneseq
        %v760 = vshrl.u32 %v759, 7
        %v761 = vsub.s32 %v758, %v760
        %v762 = vrot.slane %v748, %v761
        %v763 = vcombine.low %v755, %v762
        %v764 = vcombine.low %v727, %v728
        %v765 = vcombine.low %v729, %v730
        %v767 = vunpack.c.l.s4 1983009808
        %v768 = vunpack.c.0.s8 %v767
        %v769 = vlaneseq
        %v770 = vshrl.u32 %v769, 7
        %v771 = vsub.s32 %v768, %v770
        %v772 = vrot.slane %v764, %v771
        %v774 = vunpack.c.l.s4 1983009808
        %v775 = vunpack.c.0.s8 %v774
        %v776 = vlaneseq
        %v777 = vshrl.u32 %v776, 7
        %v778 = vsub.s32 %v775, %v777
        %v779 = vrot.slane %v765, %v778
        %v780 = vcombine.low %v772, %v779
        %v781 = vcombine.low %v731, %v732
        %v782 = vcombine.low %v733, %v734
        %v784 = vunpack.c.l.s4 1983009808
        %v785 = vunpack.c.0.s8 %v784
        %v786 = vlaneseq
        %v787 = vshrl.u32 %v786, 7
        %v788 = vsub.s32 %v785, %v787
        %v789 = vrot.slane %v781, %v788
        %v791 = vunpack.c.l.s4 1983009808
        %v792 = vunpack.c.0.s8 %v791
        %v793 = vlaneseq
        %v794 = vshrl.u32 %v793, 7
        %v795 = vsub.s32 %v792, %v794
        %v796 = vrot.slane %v782, %v795
        %v797 = vcombine.low %v789, %v796
        %801 = vst [vmem:[%s345] sm:$0xff] %v763
        %802 = vst [vmem:[%s345 + $0x8] sm:$0xff] %v780
        %803 = vst [vmem:[%s345 + $0x10] sm:$0xff] %v797
        %s804 = sand.u32 %s175, 1
        %s805 = scalar_lea.sflag [#allocation4], %s804
        %s806 = sand.u32 %s175, 1
        %s807 = smul.addr %s806, 16
        %s808 = scalar_lea.vmem [#allocation7], %s807
        %s809 = sand.u32 %s201, 1
        %s810 = scalar_lea.sflag [#allocation9], %s809
        %s811 = sand.u32 %s201, 1
        %s812 = smul.addr %s811, 24
        %s813 = scalar_lea.vmem [#allocation8], %s812
        // Predicated region
        $region53: #{tpu_custom_call.1} parent=43 // pred_check
          %p814 = pneg %p185
        $region54: #{tpu_custom_call.1} parent=43 // pred_check_branch
          %816 = sbr.rel (%p814) target = $region56
        $region55: #{tpu_custom_call.1} parent=43 // pred_region
          %s817 = smul.u32 4, %s31
          %s819 = ssub.s32 256, 256
          %820 = vsyncadd %s805, %s819
          %s821 = smul.addr %s817, 64
          %s822 = scalar_lea.hbm %s6, %s821
          %s824 = sshll.u32 %s808, 4
          %s825 = int_to_ptr.vmem [resolvable:$true] %s824
          %827 = dma.vmem_to_hbm [thread:$0]  %s825, 256, %s822, %s805
        $region56: #{tpu_custom_call.1} parent=43 // pred_fallthru
          _
        // Predicated region
        $region57: #{tpu_custom_call.1} parent=43 // pred_check
          %p828 = pneg %p211
        $region58: #{tpu_custom_call.1} parent=43 // pred_check_branch
          %830 = sbr.rel (%p828) target = $region60
        $region59: #{tpu_custom_call.1} parent=43 // pred_region
          %s831 = smul.u32 4, %s31
          %s833 = ssub.s32 384, 384
          %834 = vsyncadd %s810, %s833
          %s835 = smul.addr %s831, 32
          %s836 = scalar_lea.hbm %s7, %s835
          %s837 = sshll.u32 %s813, 4
          %s838 = int_to_ptr.vmem [resolvable:$true] %s837
          %843 = dma.vmem_to_hbm [thread:$0]  %s838, 384, %s836, %s810, 128, 512, 8
        $region60: #{tpu_custom_call.1} parent=43 // pred_fallthru
          _
      $region44: #{tpu_custom_call.1} parent=5 // pred_fallthru
        _
      %p844 = scmp.le.s32.totalorder 2, %s26
      // Predicated region
      $region61: #{tpu_custom_call.1} parent=5 // pred_check
        %p845 = pneg %p844
      $region62: #{tpu_custom_call.1} parent=5 // pred_check_branch
        %847 = sbr.rel (%p845) target = $region64
      $region63: #{tpu_custom_call.1} parent=5 // pred_region
        %s848 = ssub.s32 %s26, 2
        // Predicated region
        $region65: #{tpu_custom_call.1} parent=63 // pred_check
          %p849 = pneg %p191
        $region66: #{tpu_custom_call.1} parent=63 // pred_check_branch
          %851 = sbr.rel (%p849) target = $region68
        $region67: #{tpu_custom_call.1} parent=63 // pred_region
          %s852 = sand.u32 %s176, 1
          %s853 = scalar_lea.sflag [#allocation4], %s852
          %s854 = sand.u32 %s176, 1
          %s855 = smul.addr %s854, 16
          %s856 = scalar_lea.vmem [#allocation7], %s855
          %857 = dma.done %s853, 256
        $region68: #{tpu_custom_call.1} parent=63 // pred_fallthru
          _
        // Predicated region
        $region69: #{tpu_custom_call.1} parent=63 // pred_check
          %p858 = pneg %p217
        $region70: #{tpu_custom_call.1} parent=63 // pred_check_branch
          %860 = sbr.rel (%p858) target = $region72
        $region71: #{tpu_custom_call.1} parent=63 // pred_region
          %s861 = sand.u32 %s202, 1
          %s862 = scalar_lea.sflag [#allocation9], %s861
          %s863 = sand.u32 %s202, 1
          %s864 = smul.addr %s863, 24
          %s865 = scalar_lea.vmem [#allocation8], %s864
          %866 = dma.done %s862, 384
        $region72: #{tpu_custom_call.1} parent=63 // pred_fallthru
          _
      $region64: #{tpu_custom_call.1} parent=5 // pred_fallthru
        _
    $region6: #{tpu_custom_call.1} parent=1 // loop_footer
      %s30 = sadd.s32 1, %s26
    $region7: #{tpu_custom_call.1} parent=1 // loop_footer_branch
      %25 = sbr.rel target = $region3
    $region8: #{tpu_custom_call.1} parent=1 // loop_exit
      _
    %867 = vsyncpa [#allocation3], 1
    %s868 = scalar_lea.sflag [#allocation3], 1
    %869 = vsyncpa %s868, 1
    %870 = vsyncpa [#allocation6], 1
    %s871 = scalar_lea.sflag [#allocation6], 1
    %872 = vsyncpa %s871, 1
    %873 = vsyncpa [#allocation4], 1
    %s874 = scalar_lea.sflag [#allocation4], 1
    %875 = vsyncpa %s874, 1
    %876 = vsyncpa [#allocation9], 1
    %s877 = scalar_lea.sflag [#allocation9], 1
    %878 = vsyncpa %s877, 1

</llo_original>
